<compile_context>
chip_gen: v7x
topology: tpu7x:2x2x1
jax: 0.10.0
libtpu: 0.0.40
codegen_flags: <defaults>
</compile_context>

<pallas_src>
import functools

import jax
import jax.numpy as jnp
from jax import lax
from jax.experimental import pallas as pl
from jax.experimental.pallas import tpu as pltpu

_NEG_BIG = -1e30  # finite stand-in for -inf in the masked softmax


def _round_up(v, m):
    return (v + m - 1) // m * m


# ---------------------------------------------------------------------------
# Fused kernel: one (tm, tk) x (tk, tn) MXU step of scores = x @ W + b,
# with the gate-column softmax fused into the final K step of N-tile 0.
# ---------------------------------------------------------------------------
def _fused_moe_kernel(x_ref, w_ref, b_ref, out_ref, acc_ref, *,
                      num_gate_cols, gate_pad):
    # program_id / num_programs are read at kernel top level only.
    j = pl.program_id(0)             # N tile (fused gate + expert columns)
    k = pl.program_id(2)             # K tile (reduction over features)
    nk = pl.num_programs(2)

    @pl.when(k == 0)
    def _():
        acc_ref[...] = jnp.zeros_like(acc_ref)

    acc_ref[...] += jnp.dot(x_ref[...], w_ref[...],
                            preferred_element_type=jnp.float32)

    @pl.when(k == nk - 1)
    def _():
        out = acc_ref[...] + b_ref[...]          # (tm, tn); bias broadcast once

        @pl.when(j != 0)
        def _():
            out_ref[...] = out.astype(out_ref.dtype)

        @pl.when(j == 0)
        def _():
            # Gate scores live in the first `gate_pad` (128-aligned) lanes of
            # N-tile 0; only columns < num_gate_cols are real gate columns.
            gate = out[:, :gate_pad]
            col = lax.broadcasted_iota(jnp.int32, gate.shape, 1)
            is_gate = col < num_gate_cols
            masked = jnp.where(is_gate, gate, _NEG_BIG)
            m = jnp.max(masked, axis=-1, keepdims=True)
            e = jnp.exp(masked - m)              # padding lanes underflow to 0
            denom = jnp.sum(e, axis=-1, keepdims=True)
            probs = jnp.where(is_gate, e / denom, 0.0)
            out_ref[:, :gate_pad] = probs.astype(out_ref.dtype)
            if out.shape[1] > gate_pad:          # static: expert cols in tile 0
                out_ref[:, gate_pad:] = out[:, gate_pad:].astype(out_ref.dtype)


# ---------------------------------------------------------------------------
# One-time parameter fusion (hoisted out of the per-call path).
# ---------------------------------------------------------------------------
def build_fused_params(wg, bg, we, be, *, tn=256, tk=512):
    """Fuse gate + expert weights into one lane-dense, padded, bf16 matrix.

    Column layout of the fused matrix:
      [0, E)                  gate columns
      [E, gate_pad)           zero padding (gate_pad = round_up(E, 128))
      gate_pad + e*C + c      expert e, output column c
      [gate_pad + E*C, Np)    zero padding to the N tile size
    """
    D, E = wg.shape
    C = we.shape[2]
    gate_pad = _round_up(E, 128)
    N = gate_pad + E * C

    tn = max(min(tn, _round_up(N, 128)), gate_pad)
    tk = min(tk, _round_up(D, 128))
    Np = _round_up(N, tn)
    Dp = _round_up(D, tk)

    we_flat = jnp.transpose(we, (1, 0, 2)).reshape(D, E * C)
    w_fused = jnp.zeros((Dp, Np), jnp.float32)
    w_fused = w_fused.at[:D, :E].set(wg.astype(jnp.float32))
    w_fused = w_fused.at[:D, gate_pad:gate_pad + E * C].set(
        we_flat.astype(jnp.float32))
    w_fused = w_fused.astype(jnp.bfloat16)       # bf16 MXU feed

    b_fused = jnp.zeros((1, Np), jnp.float32)
    b_fused = b_fused.at[:, :E].set(bg.reshape(1, E).astype(jnp.float32))
    b_fused = b_fused.at[:, gate_pad:gate_pad + E * C].set(
        be.reshape(1, E * C).astype(jnp.float32))

    meta = dict(E=E, C=C, gate_pad=gate_pad, tn=tn, tk=tk)
    return w_fused, b_fused, meta


# ---------------------------------------------------------------------------
# Forward pass from pre-fused params.
# ---------------------------------------------------------------------------
@functools.partial(jax.jit,
                   static_argnames=("E", "C", "gate_pad", "tn", "tk", "tm"))
def moe_forward_fused(x, w_fused, b_fused, *, E, C, gate_pad, tn, tk, tm=256):
    """x: (B, D).  Returns dict(probs=(B, E), logits=(B, E, C)); logits[:, e]
    is expert e's output (== torch.stack(logits, dim=1) in the reference)."""
    B, D = x.shape
    Dp, Np = w_fused.shape

    tm = min(tm, _round_up(B, 16))               # 16: bf16 sublane packing
    Bp = _round_up(B, tm)

    # Zero-padding along K (D -> Dp) is a correctness requirement for the
    # reduction; B padding is merely wasted (sliced-off) rows.
    xp = jnp.zeros((Bp, Dp), jnp.bfloat16).at[:B, :D].set(
        x.astype(jnp.bfloat16))

    grid = (Np // tn, Bp // tm, Dp // tk)        # (n-tile, b-tile, k-tile)

    out = pl.pallas_call(
        functools.partial(_fused_moe_kernel,
                          num_gate_cols=E, gate_pad=gate_pad),
        out_shape=jax.ShapeDtypeStruct((Bp, Np), jnp.float32),
        grid=grid,
        in_specs=[
            # activation tile: depends on (b-tile, k-tile)
            pl.BlockSpec((tm, tk), lambda j, i, k: (i, k)),
            # fused W tile: independent of the batch tile, so it stays resident
            # in VMEM across batch tiles when D fits a single K tile.
            pl.BlockSpec((tk, tn), lambda j, i, k: (k, j)),
            # fused bias row
            pl.BlockSpec((1, tn), lambda j, i, k: (0, j)),
        ],
        out_specs=pl.BlockSpec((tm, tn), lambda j, i, k: (i, j)),
        scratch_shapes=[pltpu.VMEM((tm, tn), jnp.float32)],
        compiler_params=pltpu.CompilerParams(
            dimension_semantics=("parallel", "parallel", "arbitrary")),
    )(xp, w_fused, b_fused)

    probs = out[:B, :E]                                     # lane-aligned start
    logits = out[:B, gate_pad:gate_pad + E * C].reshape(B, E, C)
    return {"probs": probs, "logits": logits}


def moe_forward(x, wg, bg, we, be, *, tm=256, tn=256, tk=512):
    """Convenience one-shot wrapper (fuses params on every call; prefer calling
    build_fused_params once and moe_forward_fused per step)."""
    w_fused, b_fused, meta = build_fused_params(wg, bg, we, be, tn=tn, tk=tk)
    return moe_forward_fused(x, w_fused, b_fused, tm=tm, **meta)


def _reference_forward(x, wg, bg, we, be):
    probs = jax.nn.softmax(x @ wg + bg, axis=-1)
    logits = jnp.stack([x @ we[e] + be[e, 0] for e in range(we.shape[0])],
                       axis=1)  # (B, E, C)
    return {"probs": probs, "logits": logits}


if __name__ == "__main__":
    # Small deterministic shapes: batch=8, features=32, experts=4, classes=8
    B, D, E, C = 8, 32, 4, 8

    key = jax.random.PRNGKey(0)
    kx, kwg, kbg, kwe, kbe = jax.random.split(key, 5)

    x = jax.random.normal(kx, (B, D), dtype=jnp.float32)
    wg = jax.random.normal(kwg, (D, E), dtype=jnp.float32) * 0.1
    bg = jax.random.normal(kbg, (1, E), dtype=jnp.float32) * 0.1
    we = jax.random.normal(kwe, (E, D, C), dtype=jnp.float32) * 0.1
    be = jax.random.normal(kbe, (E, 1, C), dtype=jnp.float32) * 0.1

    # Fused weights are built once, outside the per-call path.
    w_fused, b_fused, meta = build_fused_params(wg, bg, we, be)

    out = moe_forward_fused(x, w_fused, b_fused, **meta)
    jax.block_until_ready(out["probs"])
    jax.block_until_ready(out["logits"])

    # Correctness check against a plain-JAX f32 reference.  The kernel feeds
    # the MXU bf16 (f32 accumulation), so tolerances are bf16-sized.
    ref = _reference_forward(x, wg, bg, we, be)
    assert out["probs"].shape == (B, E)
    assert out["logits"].shape == (B, E, C)
    assert jnp.allclose(out["logits"], ref["logits"], atol=2e-2, rtol=2e-2)
    assert jnp.allclose(out["probs"], ref["probs"], atol=2e-2, rtol=2e-2)
    assert jnp.allclose(jnp.sum(out["probs"], axis=-1), 1.0, atol=1e-3)

    print("KERNEL_OK")
</pallas_src>

<mosaic_0001>
module attributes {stable_mosaic.version = 11 : i64} {
  func.func @_fused_moe_kernel(%arg0: i32, %arg1: i32, %arg2: i32, %arg3: memref<16x128xbf16, #tpu.memory_space<vmem>>, %arg4: memref<128x256xbf16, #tpu.memory_space<vmem>>, %arg5: memref<1x256xf32, #tpu.memory_space<vmem>>, %arg6: memref<16x256xf32, #tpu.memory_space<vmem>>, %arg7: memref<16x256xf32, #tpu.memory_space<vmem>>) attributes {dimension_semantics = [#tpu.dimension_semantics<parallel>, #tpu.dimension_semantics<parallel>, #tpu.dimension_semantics<arbitrary>], iteration_bounds = array<i64: 1, 1, 1>, scalar_prefetch = 0 : i64, scratch_operands = 1 : i64, tpu.core_type = #tpu.core_type<tc>, window_params = [{transform_indices = @transform_0, window_bounds = array<i64: 16, 128>}, {transform_indices = @transform_1, window_bounds = array<i64: 128, 256>}, {transform_indices = @transform_2, window_bounds = array<i64: 1, 256>}, {transform_indices = @transform_3, window_bounds = array<i64: 16, 256>}]} {
    %c0_i32 = arith.constant 0 : i32
    %0 = arith.cmpi eq, %arg2, %c0_i32 : i32
    %1 = arith.extui %0 : i1 to i32
    %c0_i32_0 = arith.constant 0 : i32
    %2 = arith.cmpi ne, %1, %c0_i32_0 : i32
    scf.if %2 {
      %cst_10 = arith.constant 0.000000e+00 : f32
      %12 = vector.broadcast %cst_10 : f32 to vector<16x256xf32>
      %c0_11 = arith.constant 0 : index
      %c0_12 = arith.constant 0 : index
      %13 = vector.load %arg7[%c0_11, %c0_12] : memref<16x256xf32, #tpu.memory_space<vmem>>, vector<16x256xf32>
      tpu.vector_store %arg7[%c0_11, %c0_12], %12 {strides = array<i32>} : memref<16x256xf32, #tpu.memory_space<vmem>>, vector<16x256xf32>,
    } else {
    }
    %c0 = arith.constant 0 : index
    %c0_1 = arith.constant 0 : index
    %3 = vector.load %arg7[%c0, %c0_1] : memref<16x256xf32, #tpu.memory_space<vmem>>, vector<16x256xf32>
    %c0_2 = arith.constant 0 : index
    %c0_3 = arith.constant 0 : index
    %4 = vector.load %arg3[%c0_2, %c0_3] : memref<16x128xbf16, #tpu.memory_space<vmem>>, vector<16x128xbf16>
    %c0_4 = arith.constant 0 : index
    %c0_5 = arith.constant 0 : index
    %5 = vector.load %arg4[%c0_4, %c0_5] : memref<128x256xbf16, #tpu.memory_space<vmem>>, vector<128x256xbf16>
    %cst = arith.constant dense<0.000000e+00> : vector<16x256xf32>
    %6 = tpu.matmul %4, %5, %cst {dimension_numbers = #tpu.dot_dimension_numbers<[1], [0], [0], [1], [0, 0, 1, 1], [], []>} : vector<16x128xbf16>, vector<128x256xbf16>, vector<16x256xf32> -> vector<16x256xf32>
    %7 = arith.addf %3, %6 : vector<16x256xf32>
    %c0_6 = arith.constant 0 : index
    %c0_7 = arith.constant 0 : index
    %8 = vector.load %arg7[%c0_6, %c0_7] : memref<16x256xf32, #tpu.memory_space<vmem>>, vector<16x256xf32>
    tpu.vector_store %arg7[%c0_6, %c0_7], %7 {strides = array<i32>} : memref<16x256xf32, #tpu.memory_space<vmem>>, vector<16x256xf32>,
    %c0_i32_8 = arith.constant 0 : i32
    %9 = arith.cmpi eq, %arg2, %c0_i32_8 : i32
    %10 = arith.extui %9 : i1 to i32
    %c0_i32_9 = arith.constant 0 : i32
    %11 = arith.cmpi ne, %10, %c0_i32_9 : i32
    scf.if %11 {
      %c0_10 = arith.constant 0 : index
      %c0_11 = arith.constant 0 : index
      %12 = vector.load %arg7[%c0_10, %c0_11] : memref<16x256xf32, #tpu.memory_space<vmem>>, vector<16x256xf32>
      %c0_12 = arith.constant 0 : index
      %c0_13 = arith.constant 0 : index
      %13 = vector.load %arg5[%c0_12, %c0_13] : memref<1x256xf32, #tpu.memory_space<vmem>>, vector<1x256xf32>
      %14 = vector.broadcast %13 : vector<1x256xf32> to vector<16x256xf32>
      %15 = arith.addf %12, %14 : vector<16x256xf32>
      %c0_i32_14 = arith.constant 0 : i32
      %16 = arith.cmpi ne, %arg0, %c0_i32_14 : i32
      %17 = arith.extui %16 : i1 to i32
      %c0_i32_15 = arith.constant 0 : i32
      %18 = arith.cmpi ne, %17, %c0_i32_15 : i32
      scf.if %18 {
        %c0_18 = arith.constant 0 : index
        %c0_19 = arith.constant 0 : index
        %22 = vector.load %arg6[%c0_18, %c0_19] : memref<16x256xf32, #tpu.memory_space<vmem>>, vector<16x256xf32>
        tpu.vector_store %arg6[%c0_18, %c0_19], %15 {strides = array<i32>} : memref<16x256xf32, #tpu.memory_space<vmem>>, vector<16x256xf32>,
      } else {
      }
      %c0_i32_16 = arith.constant 0 : i32
      %19 = arith.cmpi eq, %arg0, %c0_i32_16 : i32
      %20 = arith.extui %19 : i1 to i32
      %c0_i32_17 = arith.constant 0 : i32
      %21 = arith.cmpi ne, %20, %c0_i32_17 : i32
      scf.if %21 {
        %22 = vector.extract_strided_slice %15 {offsets = [0, 0], sizes = [16, 128], strides = [1, 1]} : vector<16x256xf32> to vector<16x128xf32>
        %23 = tpu.iota {dimensions = array<i32: 1>} : vector<16x128xi32>
        %c4_i32 = arith.constant 4 : i32
        %24 = vector.broadcast %c4_i32 : i32 to vector<16x128xi32>
        %25 = arith.cmpi slt, %23, %24 : vector<16x128xi32>
        %cst_18 = arith.constant -1.000000e+30 : f32
        %26 = vector.broadcast %cst_18 : f32 to vector<16x128xf32>
        %27 = arith.select %25, %22, %26 : vector<16x128xi1>, vector<16x128xf32>
        %cst_19 = arith.constant dense<0xFF800000> : vector<16xf32>
        %28 = vector.multi_reduction <maximumf>, %27, %cst_19 [1] : vector<16x128xf32> to vector<16xf32>
        %29 = vector.shape_cast %28 : vector<16xf32> to vector<16x1xf32>
        %30 = vector.broadcast %29 : vector<16x1xf32> to vector<16x128xf32>
        %31 = arith.subf %27, %30 : vector<16x128xf32>
        %32 = math.exp %31 : vector<16x128xf32>
        %cst_20 = arith.constant dense<0.000000e+00> : vector<16xf32>
        %33 = vector.multi_reduction <add>, %32, %cst_20 [1] : vector<16x128xf32> to vector<16xf32>
        %34 = vector.shape_cast %33 : vector<16xf32> to vector<16x1xf32>
        %35 = vector.broadcast %34 : vector<16x1xf32> to vector<16x128xf32>
        %36 = arith.divf %32, %35 : vector<16x128xf32>
        %cst_21 = arith.constant 0.000000e+00 : f32
        %37 = vector.broadcast %cst_21 : f32 to vector<16x128xf32>
        %38 = arith.select %25, %36, %37 : vector<16x128xi1>, vector<16x128xf32>
        %c0_22 = arith.constant 0 : index
        %c0_23 = arith.constant 0 : index
        %39 = vector.load %arg6[%c0_22, %c0_23] : memref<16x256xf32, #tpu.memory_space<vmem>>, vector<16x128xf32>
        tpu.vector_store %arg6[%c0_22, %c0_23], %38 {strides = array<i32>} : memref<16x256xf32, #tpu.memory_space<vmem>>, vector<16x128xf32>,
        %40 = vector.extract_strided_slice %15 {offsets = [0, 128], sizes = [16, 128], strides = [1, 1]} : vector<16x256xf32> to vector<16x128xf32>
        %c0_24 = arith.constant 0 : index
        %c128 = arith.constant 128 : index
        %41 = vector.load %arg6[%c0_24, %c128] : memref<16x256xf32, #tpu.memory_space<vmem>>, vector<16x128xf32>
        tpu.vector_store %arg6[%c0_24, %c128], %40 {strides = array<i32>} : memref<16x256xf32, #tpu.memory_space<vmem>>, vector<16x128xf32>,
      } else {
      }
    } else {
    }
    return
  }
  func.func @transform_0(%arg0: i32, %arg1: i32, %arg2: i32) -> (i32, i32) {
    %c0_i32 = arith.constant 0 : i32
    return %arg1, %arg2 : i32, i32
  }
  func.func @transform_1(%arg0: i32, %arg1: i32, %arg2: i32) -> (i32, i32) {
    %c0_i32 = arith.constant 0 : i32
    return %arg2, %arg0 : i32, i32
  }
  func.func @transform_2(%arg0: i32, %arg1: i32, %arg2: i32) -> (i32, i32) {
    %c0_i32 = arith.constant 0 : i32
    %c0_i32_0 = arith.constant 0 : i32
    return %c0_i32, %arg0 : i32, i32
  }
  func.func @transform_3(%arg0: i32, %arg1: i32, %arg2: i32) -> (i32, i32) {
    %c0_i32 = arith.constant 0 : i32
    return %arg1, %arg0 : i32, i32
  }
}

</mosaic_0001>

<llo_original>
// kernel: moe_forward_fused.1
$region0: #{moe_forward_fused.1}
  #allocation0 [shape = 'u32[]', space=smem, size = 0x4, offset = 0x4, fixed_abs, tag = 'smem constant byte address 0x4 - core index']
  #allocation1 [shape = 'u32[144,128]{1,0:T(1,128)}', space=vmem, size = 0x12000, scoped, tag = 'internal scratch']
  #allocation2 [shape = 'f32[16,256]{1,0:T(8,128)}', space=vmem, size = 0x4000, scoped, tag = 'scratch operand']
  %s0 = inlined_call_operand.vmem [shape: bf16[16,128], index: 0, kind: input, shape index: {}]
  %s1 = inlined_call_operand.hbm [shape: bf16[128,256], index: 1, kind: input, shape index: {}]
  %s2 = inlined_call_operand.vmem [shape: f32[1,256], index: 2, kind: input, shape index: {}]
  %s3 = inlined_call_operand.vmem [shape: f32[16,256], index: 3, kind: output, shape index: {}]
  %s4 = sld [smem:[#allocation0]]
  $region42: #{moe_forward_fused.1} parent=0
    _
  %s6 = ssub.s32 1, %s4
  %s7 = scalar_select 0, %s6, %s4
  $region1: #{moe_forward_fused.1} parent=0
    #allocation3 [shape = 'u8[65536]{0}', space=vmem, size = 0x10000, scoped, tag = 'input window, operand 1, single buffered']
    #allocation4 [shape = 's32[1]{0}', space=sflag, size = 0x4, scoped, tag = 'scoped memory for moe_forward_fused.1']
    %8 = vsyncpa [#allocation4], 0
    // Predicated region
    $region2: #{moe_forward_fused.1} parent=1 // pred_check
      _
    $region3: #{moe_forward_fused.1} parent=1 // pred_check_branch
      %10 = sbr.rel (0) target = $region5
    $region4: #{moe_forward_fused.1} parent=1 // pred_region
      _
    $region5: #{moe_forward_fused.1} parent=1 // pred_fallthru
      _
    // Predicated region
    $region6: #{moe_forward_fused.1} parent=1 // pred_check
      _
    $region7: #{moe_forward_fused.1} parent=1 // pred_check_branch
      %12 = sbr.rel (0) target = $region9
    $region8: #{moe_forward_fused.1} parent=1 // pred_region
      %s14 = ssub.s32 2048, 2048
      %15 = vsyncadd [#allocation4], %s14
      %s16 = sshll.u32 [#allocation3], 4
      %s17 = int_to_ptr.vmem [resolvable:$true] %s16
      %22 = dma.hbm_to_vmem [thread:$0]  %s1, 2048, %s17, [#allocation4], 128, 128, 8
    $region9: #{moe_forward_fused.1} parent=1 // pred_fallthru
      _
    // Predicated region
    $region10: #{moe_forward_fused.1} parent=1 // pred_check
      _
    $region11: #{moe_forward_fused.1} parent=1 // pred_check_branch
      %24 = sbr.rel (0) target = $region13
    $region12: #{moe_forward_fused.1} parent=1 // pred_region
      _
    $region13: #{moe_forward_fused.1} parent=1 // pred_fallthru
      _
    // Predicated region
    $region14: #{moe_forward_fused.1} parent=1 // pred_check
      _
    $region15: #{moe_forward_fused.1} parent=1 // pred_check_branch
      %26 = sbr.rel (0) target = $region17
    $region16: #{moe_forward_fused.1} parent=1 // pred_region
      %27 = dma.done [#allocation4], 2048
    $region17: #{moe_forward_fused.1} parent=1 // pred_fallthru
      _
    %p29 = scmp.eq.s32.totalorder 0, 0
    // Predicated region
    $region18: #{moe_forward_fused.1} parent=1 // pred_check
      %p30 = pneg %p29
    $region19: #{moe_forward_fused.1} parent=1 // pred_check_branch
      %32 = sbr.rel (%p30) target = $region21
    $region20: #{moe_forward_fused.1} parent=1 // pred_region
      %33 = vst [vmem:[#allocation2] sm:$0xff] 0.0
      %34 = vst [vmem:[#allocation2 + $0x8] sm:$0xff] 0.0
      %35 = vst [vmem:[#allocation2 + $0x10] sm:$0xff] 0.0
      %36 = vst [vmem:[#allocation2 + $0x18] sm:$0xff] 0.0
    $region21: #{moe_forward_fused.1} parent=1 // pred_fallthru
      _
    %v37 = vld [vmem:[#allocation2] sm:$0xff]
    %v38 = vld [vmem:[#allocation2 + $0x8] sm:$0xff]
    %v39 = vld [vmem:[#allocation2 + $0x10] sm:$0xff]
    %v40 = vld [vmem:[#allocation2 + $0x18] sm:$0xff]
    %v41 = vld [vmem:[%s0] sm:$0xf]
    %v42 = vld [vmem:[%s0 + $0x4] sm:$0xf]
    %v43 = vld [vmem:[#allocation3] sm:$0xff]
    %v44 = vld [vmem:[#allocation3 + $0x8] sm:$0xff]
    %v45 = vld [vmem:[#allocation3 + $0x10] sm:$0xff]
    %v46 = vld [vmem:[#allocation3 + $0x18] sm:$0xff]
    %v47 = vld [vmem:[#allocation3 + $0x20] sm:$0xff]
    %v48 = vld [vmem:[#allocation3 + $0x28] sm:$0xff]
    %v49 = vld [vmem:[#allocation3 + $0x30] sm:$0xff]
    %v50 = vld [vmem:[#allocation3 + $0x38] sm:$0xff]
    %v51 = vld [vmem:[#allocation3 + $0x40] sm:$0xff]
    %v52 = vld [vmem:[#allocation3 + $0x48] sm:$0xff]
    %v53 = vld [vmem:[#allocation3 + $0x50] sm:$0xff]
    %v54 = vld [vmem:[#allocation3 + $0x58] sm:$0xff]
    %v55 = vld [vmem:[#allocation3 + $0x60] sm:$0xff]
    %v56 = vld [vmem:[#allocation3 + $0x68] sm:$0xff]
    %v57 = vld [vmem:[#allocation3 + $0x70] sm:$0xff]
    %v58 = vld [vmem:[#allocation3 + $0x78] sm:$0xff]
    %v61 = vunpack.c.l.b16 %v41
    %v62 = vunpack.c.l.b16 %v42
    %v63 = vpack.c.b16 %v62, %v61
    %v81 = vunpack.c.l.b16 %v43
    %v82 = vunpack.c.h.b16 %v43
    %v83 = vunpack.c.l.b16 %v44
    %v84 = vunpack.c.h.b16 %v44
    %v85 = vunpack.c.l.b16 %v45
    %v86 = vunpack.c.h.b16 %v45
    %v87 = vunpack.c.l.b16 %v46
    %v88 = vunpack.c.h.b16 %v46
    %v89 = vunpack.c.l.b16 %v47
    %v90 = vunpack.c.h.b16 %v47
    %v91 = vunpack.c.l.b16 %v48
    %v92 = vunpack.c.h.b16 %v48
    %v93 = vunpack.c.l.b16 %v49
    %v94 = vunpack.c.h.b16 %v49
    %v95 = vunpack.c.l.b16 %v50
    %v96 = vunpack.c.h.b16 %v50
    %v97 = vunpack.c.l.b16 %v51
    %v98 = vunpack.c.h.b16 %v51
    %v99 = vunpack.c.l.b16 %v52
    %v100 = vunpack.c.h.b16 %v52
    %v101 = vunpack.c.l.b16 %v53
    %v102 = vunpack.c.h.b16 %v53
    %v103 = vunpack.c.l.b16 %v54
    %v104 = vunpack.c.h.b16 %v54
    %v105 = vunpack.c.l.b16 %v55
    %v106 = vunpack.c.h.b16 %v55
    %v107 = vunpack.c.l.b16 %v56
    %v108 = vunpack.c.h.b16 %v56
    %v109 = vunpack.c.l.b16 %v57
    %v110 = vunpack.c.h.b16 %v57
    %v111 = vunpack.c.l.b16 %v58
    %v112 = vunpack.c.h.b16 %v58
    %v113 = vpack.c.b16 %v83, %v81
    %v114 = vpack.c.b16 %v84, %v82
    %v115 = vpack.c.b16 %v87, %v85
    %v116 = vpack.c.b16 %v88, %v86
    %v117 = vpack.c.b16 %v91, %v89
    %v118 = vpack.c.b16 %v92, %v90
    %v119 = vpack.c.b16 %v95, %v93
    %v120 = vpack.c.b16 %v96, %v94
    %v121 = vpack.c.b16 %v99, %v97
    %v122 = vpack.c.b16 %v100, %v98
    %v123 = vpack.c.b16 %v103, %v101
    %v124 = vpack.c.b16 %v104, %v102
    %v125 = vpack.c.b16 %v107, %v105
    %v126 = vpack.c.b16 %v108, %v106
    %v127 = vpack.c.b16 %v111, %v109
    %v128 = vpack.c.b16 %v112, %v110
    %145 = vmatprep.subr.bf16.mxu0 %v114
    %146 = vmatpush1.bf16.msra.mxu0 %v113
    %147 = vmatprep.subr.bf16.mxu0 %v116
    %148 = vmatpush1.bf16.msra.mxu0 %v115
    %149 = vmatprep.subr.bf16.mxu0 %v118
    %150 = vmatpush1.bf16.msra.mxu0 %v117
    %151 = vmatprep.subr.bf16.mxu0 %v120
    %152 = vmatpush1.bf16.msra.mxu0 %v119
    %153 = vmatprep.subr.bf16.mxu0 %v122
    %154 = vmatpush1.bf16.msra.mxu0 %v121
    %155 = vmatprep.subr.bf16.mxu0 %v124
    %156 = vmatpush1.bf16.msra.mxu0 %v123
    %157 = vmatprep.subr.bf16.mxu0 %v126
    %158 = vmatpush1.bf16.msra.mxu0 %v125
    %159 = vmatprep.subr.bf16.mxu0 %v128
    %160 = vmatpush1.bf16.msra.mxu0 %v127
    %161 = vmatprep.subr.bf16.mxu0 0
    %162 = vmatpush1.bf16.msra.mxu0 0
    %163 = vmatprep.subr.bf16.mxu0 0
    %164 = vmatpush1.bf16.msra.mxu0 0
    %165 = vmatprep.subr.bf16.mxu0 0
    %166 = vmatpush1.bf16.msra.mxu0 0
    %167 = vmatprep.subr.bf16.mxu0 0
    %168 = vmatpush1.bf16.msra.mxu0 0
    %169 = vmatprep.subr.bf16.mxu0 0
    %170 = vmatpush1.bf16.msra.mxu0 0
    %171 = vmatprep.subr.bf16.mxu0 0
    %172 = vmatpush1.bf16.msra.mxu0 0
    %173 = vmatprep.subr.bf16.mxu0 0
    %174 = vmatpush1.bf16.msra.mxu0 0
    %175 = vmatprep.subr.bf16.mxu0 0
    %176 = vmatpush1.bf16.msra.mxu0 0
    %177 = vmatprep.mubr.bf16.mxu0 0
    %178 = vmatmul.mubr.bf16.gmra.mrb[0].mxu0 %v63
    %v179 = vpop.f32.mrb[0].mxu0
    %v180 = vadd.f32 0.0, %v179
    %v181 = vpop.f32.mrb[0].mxu0
    %v182 = vadd.f32 0.0, %v181
    %v183 = vpop.f32.mrb[0].mxu0
    %v184 = vadd.f32 0.0, %v183
    %v185 = vpop.f32.mrb[0].mxu0
    %v186 = vadd.f32 0.0, %v185
    %187 = vdwg.mxu0
    %v188 = vadd.f32 %v37, %v180
    %v189 = vadd.f32 %v38, %v182
    %v190 = vadd.f32 %v39, %v184
    %v191 = vadd.f32 %v40, %v186
    %192 = vst [vmem:[#allocation2] sm:$0xff] %v188
    %193 = vst [vmem:[#allocation2 + $0x8] sm:$0xff] %v189
    %194 = vst [vmem:[#allocation2 + $0x10] sm:$0xff] %v190
    %195 = vst [vmem:[#allocation2 + $0x18] sm:$0xff] %v191
    // Predicated region
    $region22: #{moe_forward_fused.1} parent=1 // pred_check
      %p196 = pneg %p29
    $region23: #{moe_forward_fused.1} parent=1 // pred_check_branch
      %198 = sbr.rel (%p196) target = $region25
    $region24: #{moe_forward_fused.1} parent=1 // pred_region
      %v199 = vld [vmem:[#allocation2] sm:$0xff]
      %v200 = vld [vmem:[#allocation2 + $0x8] sm:$0xff]
      %v201 = vld [vmem:[#allocation2 + $0x10] sm:$0xff]
      %v202 = vld [vmem:[#allocation2 + $0x18] sm:$0xff]
      %v203 = vld [vmem:[%s2] sm:$0x3]
      %v205 = vlaneseq
      %v206 = vshrl.u32 %v205, 7
      %v207 = vsub.s32 0, %v206
      %v208 = vrot.slane %v203, %v207
      %v209 = vlaneseq
      %v210 = vshrl.u32 %v209, 7
      %v211 = vsub.s32 1, %v210
      %v212 = vrot.slane %v203, %v211
      %v215 = vadd.f32 %v199, %v208
      %v216 = vadd.f32 %v200, %v212
      %v217 = vadd.f32 %v201, %v208
      %v218 = vadd.f32 %v202, %v212
      %p219 = scmp.ne.s32.totalorder 0, 0
      // Predicated region
      $region26: #{moe_forward_fused.1} parent=24 // pred_check
        %p220 = pneg %p219
      $region27: #{moe_forward_fused.1} parent=24 // pred_check_branch
        %222 = sbr.rel (%p220) target = $region29
      $region28: #{moe_forward_fused.1} parent=24 // pred_region
        %223 = vst [vmem:[%s3] sm:$0xff] %v215
        %224 = vst [vmem:[%s3 + $0x8] sm:$0xff] %v216
        %225 = vst [vmem:[%s3 + $0x10] sm:$0xff] %v217
        %226 = vst [vmem:[%s3 + $0x18] sm:$0xff] %v218
      $region29: #{moe_forward_fused.1} parent=24 // pred_fallthru
        _
      %p227 = scmp.eq.s32.totalorder 0, 0
      // Predicated region
      $region30: #{moe_forward_fused.1} parent=24 // pred_check
        %p228 = pneg %p227
      $region31: #{moe_forward_fused.1} parent=24 // pred_check_branch
        %230 = sbr.rel (%p228) target = $region33
      $region32: #{moe_forward_fused.1} parent=24 // pred_region
        %v231 = vlaneseq
        %v232 = vand.u32 %v231, 127
        %vm233 = vcmp.lt.s32.totalorder %v232, 4
        %v234 = vsel %vm233, %v215, -1e+30
        %v235 = vsel %vm233, %v217, -1e+30
        %236 = vmax.xlane.f32.xlu0 %v234
        %v237 = vpop.xlane.xlu0 %236
        %238 = vmax.xlane.f32.xlu0 %v235
        %v239 = vpop.xlane.xlu0 %238
        %v240 = vsub.f32 %v234, %v237
        %v241 = vsub.f32 %v235, %v239
        %v242 = vmul.f32 %v240, 1.442695
        %v243 = vpow.pop %v242
        %v244 = vmul.f32 %v241, 1.442695
        %v245 = vpow.pop %v244
        %246 = vadd.xlane.f32.xlu0 %v243
        %v247 = vpop.xlane.xlu0 %246
        %248 = vadd.xlane.f32.xlu0 %v245
        %v249 = vpop.xlane.xlu0 %248
        %v250 = vrcp.pop %v247
        %v251 = vmul.f32 %v243, %v250
        %v252 = vrcp.pop %v249
        %v253 = vmul.f32 %v245, %v252
        %v254 = vsel %vm233, %v251, 0.0
        %v255 = vsel %vm233, %v253, 0.0
        %256 = vst [vmem:[%s3] sm:$0xff] %v254
        %257 = vst [vmem:[%s3 + $0x10] sm:$0xff] %v255
        %258 = vst [vmem:[%s3 + $0x8] sm:$0xff] %v216
        %259 = vst [vmem:[%s3 + $0x18] sm:$0xff] %v218
      $region33: #{moe_forward_fused.1} parent=24 // pred_fallthru
        _
    $region25: #{moe_forward_fused.1} parent=1 // pred_fallthru
      _
    // Predicated region
    $region34: #{moe_forward_fused.1} parent=1 // pred_check
      _
    $region35: #{moe_forward_fused.1} parent=1 // pred_check_branch
      %261 = sbr.rel (0) target = $region37
    $region36: #{moe_forward_fused.1} parent=1 // pred_region
      _
    $region37: #{moe_forward_fused.1} parent=1 // pred_fallthru
      _
    // Predicated region
    $region38: #{moe_forward_fused.1} parent=1 // pred_check
      _
    $region39: #{moe_forward_fused.1} parent=1 // pred_check_branch
      %263 = sbr.rel (0) target = $region41
    $region40: #{moe_forward_fused.1} parent=1 // pred_region
      _
    $region41: #{moe_forward_fused.1} parent=1 // pred_fallthru
      _
    %264 = vsyncpa [#allocation4], 1

</llo_original>
